<compile_context>
chip_gen: v5e
topology: v5e:2x2
jax: 0.10.0
libtpu: 0.0.40
codegen_flags: <defaults>
</compile_context>

<pallas_src>
import functools

import jax
import jax.numpy as jnp
from jax import lax
from jax.experimental import pallas as pl
from jax.experimental.pallas import tpu as pltpu


def _vd_kernel(x_ref, w_ref, nrow_ref, ncol_ref, o_ref, *,
               batch_tile, num_points, num_groups):
    N = num_points
    G = num_groups
    win = N // 4                      # pooling kernel == stride (floor-mode)
    NEG_INF = jnp.float32(-jnp.inf)

    # 1x1 Conv2d (no bias) for ALL Bt batches at once: one lane-dense bf16 MXU matmul.
    conv = jnp.dot(w_ref[...], x_ref[...],
                   preferred_element_type=jnp.float32)        # (C_out, Bt*N) f32

    nrow = nrow_ref[...]              # (3, Bt*N)  f32
    ncol = ncol_ref[...]              # (Bt*N, 3)  f32

    pooled_cols = []
    # batch_tile is a small static count; this unrolls at trace time.
    for b in range(batch_tile):
        # --- squared distance to the LAST new_xyz point, in both orientations.
        # Both use the identical scalar sequence dx*dx + dy*dy + dz*dz on identical f32
        # values -> bitwise-equal results, so ties / strict comparisons are consistent.
        row = nrow[:, b * N:(b + 1) * N]                      # (3, N)
        dr = row - row[:, N - 1:N]                            # (3, N)
        d_row = dr[0:1] * dr[0:1] + dr[1:2] * dr[1:2] + dr[2:3] * dr[2:3]   # (1, N)

        col = ncol[b * N:(b + 1) * N, :]                      # (N, 3)
        dc = col - col[N - 1:N, :]                            # (N, 3)
        d_col = dc[:, 0:1] * dc[:, 0:1] + dc[:, 1:2] * dc[:, 1:2] + dc[:, 2:3] * dc[:, 2:3]  # (N, 1)

        # Stable ascending rank == position returned by topk(largest=False, sorted=True).
        # TODO(synk): tile this O(N^2) block over 128-lane column chunks for large N.
        ii = lax.broadcasted_iota(jnp.int32, (N, N), 0)
        jj = lax.broadcasted_iota(jnp.int32, (N, N), 1)
        precedes = (d_col < d_row) | ((d_col == d_row) & (ii < jj))
        rank = jnp.sum(precedes.astype(jnp.int32), axis=0, keepdims=True)   # (1, N)

        # Rank-bucket masked max == "gather in sorted order, then max-pool windows of
        # `win`".  Points with rank >= 4*win (non-divisible N) match no bucket and are
        # dropped, matching F.max_pool2d floor semantics.  No integer division needed.
        conv_b = conv[:, b * N:(b + 1) * N]                   # (C_out, N)
        for g in range(G):
            in_g = (rank >= g * win) & (rank < (g + 1) * win)  # (1, N) bool
            masked = jnp.where(in_g, conv_b, NEG_INF)          # (C_out, N)
            pooled_cols.append(jnp.max(masked, axis=1, keepdims=True))  # (C_out, 1)

    # Single slab store for the whole grid step (no per-group width-1 stores).
    o_ref[...] = jnp.concatenate(pooled_cols, axis=1).astype(o_ref.dtype)


def _pick_batch_tile(B, N, lane_target=512):
    """Largest divisor of B whose folded lane width Bt*N stays <= lane_target.

    Bigger Bt => lane-dense matmul / stores and fewer grid steps (amortizes the
    ~0.35us per-step overhead).  When B // Bt >= 2 the remaining grid axis is marked
    "parallel" so v7x can shard it across its two TensorCores.
    """
    bt = 1
    for cand in range(1, B + 1):
        if B % cand == 0 and cand * N <= lane_target:
            bt = cand
    return bt


def vd_module_forward(xyz, new_xyz, features, weight, use_xyz=True):
    """Pallas implementation of VDModule.forward.

    xyz:      (B, N, 3) float32
    new_xyz:  (B, M, 3) float32  (M must equal N, as required implicitly by the module)
    features: (B, C_f, N) float32 or None
    weight:   (C_out, C_in) float32  (1x1 conv weight, squeezed)
    returns:  (B, C_out, 4) float32
    """
    B, N, _ = xyz.shape
    M = new_xyz.shape[1]
    assert M == N, "grouping_operation indices must be valid for the N-point feature axis"
    assert N >= 4, "max_pool2d window N//4 must be >= 1"

    grouped_xyz = jnp.transpose(xyz, (0, 2, 1))               # (B, 3, N)
    if features is not None:
        x = jnp.concatenate([grouped_xyz, features], axis=1) if use_xyz else features
    else:
        x = grouped_xyz

    C_in = x.shape[1]
    C_out = weight.shape[0]
    assert weight.shape[1] == C_in

    win = N // 4
    G = (N - win) // win + 1                                  # floor-mode pooling (== 4)

    Bt = _pick_batch_tile(B, N)
    T = B // Bt

    # Wrapper-side layout plumbing: fold Bt batches into lane-dense 2-D slabs.
    x_lanes = (x.astype(jnp.float32)
                 .reshape(T, Bt, C_in, N)
                 .transpose(0, 2, 1, 3)
                 .reshape(T, C_in, Bt * N)
                 .astype(jnp.bfloat16))                       # (T, C_in, Bt*N)
    w_bf = weight.astype(jnp.bfloat16)                        # (C_out, C_in)

    nxyz = new_xyz.astype(jnp.float32)
    n_row = (nxyz.reshape(T, Bt, N, 3)
                 .transpose(0, 3, 1, 2)
                 .reshape(T, 3, Bt * N))                      # (T, 3, Bt*N)
    n_col = nxyz.reshape(T, Bt * N, 3)                        # (T, Bt*N, 3)

    kern = functools.partial(_vd_kernel, batch_tile=Bt, num_points=N, num_groups=G)

    out = pl.pallas_call(
        kern,
        out_shape=jax.ShapeDtypeStruct((T, C_out, Bt * G), jnp.float32),
        grid_spec=pltpu.PrefetchScalarGridSpec(
            num_scalar_prefetch=0,
            grid=(T,),
            in_specs=[
                pl.BlockSpec((pl.Squeezed(), C_in, Bt * N), lambda t: (t, 0, 0)),
                pl.BlockSpec((C_out, C_in), lambda t: (0, 0)),
                pl.BlockSpec((pl.Squeezed(), 3, Bt * N), lambda t: (t, 0, 0)),
                pl.BlockSpec((pl.Squeezed(), Bt * N, 3), lambda t: (t, 0, 0)),
            ],
            out_specs=pl.BlockSpec((pl.Squeezed(), C_out, Bt * G), lambda t: (t, 0, 0)),
        ),
        compiler_params=pltpu.CompilerParams(dimension_semantics=("parallel",)),
    )(x_lanes, w_bf, n_row, n_col)

    # (T, C_out, Bt*G) -> (B, C_out, G)
    return out.reshape(T, C_out, Bt, G).transpose(0, 2, 1, 3).reshape(B, C_out, G)


def vd_module_reference(xyz, new_xyz, features, weight, use_xyz=True):
    """Pure-JAX (f32) reference mirroring the PyTorch semantics."""
    B, N, _ = xyz.shape
    gx = jnp.transpose(xyz, (0, 2, 1))
    if features is not None:
        x = jnp.concatenate([gx, features], axis=1) if use_xyz else features
    else:
        x = gx
    conv = jnp.einsum("oc,bcn->bon", weight, x)               # (B, C_out, N)
    center = new_xyz[:, -1:, :]
    dist = jnp.sum((new_xyz - center) ** 2, axis=-1)          # (B, M)
    idx = jnp.argsort(dist, axis=-1)[:, :N]                   # stable ascending
    gathered = jnp.take_along_axis(conv, idx[:, None, :], axis=2)   # (B, C_out, N)
    w = N // 4
    ng = (N - w) // w + 1
    pooled = jnp.max(gathered[:, :, :ng * w].reshape(B, conv.shape[1], ng, w), axis=-1)
    return pooled


if __name__ == "__main__":
    # Small deterministic shapes consistent with the module.
    B, N = 2, 16
    use_xyz = True
    channels = 16                       # Conv2d input channels
    count = 4
    C_out = channels // count
    C_f = channels - 3 if use_xyz else channels

    key = jax.random.PRNGKey(0)
    k_xyz, k_new, k_feat, k_w = jax.random.split(key, 4)

    xyz = jax.random.normal(k_xyz, (B, N, 3), dtype=jnp.float32)
    new_xyz = jax.random.normal(k_new, (B, N, 3), dtype=jnp.float32)
    features = jax.random.normal(k_feat, (B, C_f, N), dtype=jnp.float32)

    # Deterministic "kaiming-like" init for the 1x1 conv weight (bias=False).
    weight = jax.random.normal(k_w, (C_out, channels), dtype=jnp.float32) * (2.0 / channels) ** 0.5

    out = vd_module_forward(xyz, new_xyz, features, weight, use_xyz=use_xyz)
    out = jax.block_until_ready(out)

    ref = jax.block_until_ready(vd_module_reference(xyz, new_xyz, features, weight, use_xyz=use_xyz))

    assert out.shape == (B, C_out, 4), f"unexpected output shape {out.shape}"
    # Conv operands run in bf16 on the MXU (f32 accumulate); distances/rank stay in f32,
    # so grouping matches the reference exactly and only the conv values carry bf16 noise.
    assert jnp.allclose(out, ref, rtol=2e-2, atol=2e-2), "Pallas kernel mismatch vs reference"

    print("KERNEL_OK")
</pallas_src>

<mosaic_0001>
module attributes {stable_mosaic.version = 11 : i64} {
  func.func @_vd_kernel(%arg0: i32, %arg1: memref<1x16x32xbf16, #tpu.memory_space<vmem>>, %arg2: memref<4x16xbf16, #tpu.memory_space<vmem>>, %arg3: memref<1x3x32xf32, #tpu.memory_space<vmem>>, %arg4: memref<1x32x3xf32, #tpu.memory_space<vmem>>, %arg5: memref<1x4x8xf32, #tpu.memory_space<vmem>>) attributes {dimension_semantics = [#tpu.dimension_semantics<parallel>], iteration_bounds = array<i64: 1>, scalar_prefetch = 0 : i64, scratch_operands = 0 : i64, tpu.core_type = #tpu.core_type<tc>, window_params = [{transform_indices = @transform_0, window_bounds = array<i64: 1, 16, 32>}, {pipeline_mode = #tpu.pipeline_mode<synchronous>, transform_indices = @transform_1, window_bounds = array<i64: 4, 16>}, {transform_indices = @transform_2, window_bounds = array<i64: 1, 3, 32>}, {transform_indices = @transform_3, window_bounds = array<i64: 1, 32, 3>}, {transform_indices = @transform_4, window_bounds = array<i64: 1, 4, 8>}]} {
    %c0 = arith.constant 0 : index
    %c0_0 = arith.constant 0 : index
    %0 = vector.load %arg2[%c0, %c0_0] : memref<4x16xbf16, #tpu.memory_space<vmem>>, vector<4x16xbf16>
    %c0_1 = arith.constant 0 : index
    %c0_2 = arith.constant 0 : index
    %c0_3 = arith.constant 0 : index
    %1 = vector.load %arg1[%c0_1, %c0_2, %c0_3] : memref<1x16x32xbf16, #tpu.memory_space<vmem>>, vector<1x16x32xbf16>
    %2 = vector.shape_cast %1 : vector<1x16x32xbf16> to vector<16x32xbf16>
    %cst = arith.constant dense<0.000000e+00> : vector<4x32xf32>
    %3 = tpu.matmul %0, %2, %cst {dimension_numbers = #tpu.dot_dimension_numbers<[1], [0], [0], [1], [0, 0, 1, 1], [], []>} : vector<4x16xbf16>, vector<16x32xbf16>, vector<4x32xf32> -> vector<4x32xf32>
    %c0_4 = arith.constant 0 : index
    %c0_5 = arith.constant 0 : index
    %c0_6 = arith.constant 0 : index
    %4 = vector.load %arg3[%c0_4, %c0_5, %c0_6] : memref<1x3x32xf32, #tpu.memory_space<vmem>>, vector<1x3x32xf32>
    %5 = vector.shape_cast %4 : vector<1x3x32xf32> to vector<3x32xf32>
    %c0_7 = arith.constant 0 : index
    %c0_8 = arith.constant 0 : index
    %c0_9 = arith.constant 0 : index
    %6 = vector.load %arg4[%c0_7, %c0_8, %c0_9] : memref<1x32x3xf32, #tpu.memory_space<vmem>>, vector<1x32x3xf32>
    %7 = vector.shape_cast %6 : vector<1x32x3xf32> to vector<32x3xf32>
    %8 = vector.extract_strided_slice %5 {offsets = [0, 0], sizes = [3, 16], strides = [1, 1]} : vector<3x32xf32> to vector<3x16xf32>
    %9 = vector.extract_strided_slice %8 {offsets = [0, 15], sizes = [3, 1], strides = [1, 1]} : vector<3x16xf32> to vector<3x1xf32>
    %10 = vector.broadcast %9 : vector<3x1xf32> to vector<3x16xf32>
    %11 = arith.subf %8, %10 : vector<3x16xf32>
    %12 = vector.extract_strided_slice %11 {offsets = [0, 0], sizes = [1, 16], strides = [1, 1]} : vector<3x16xf32> to vector<1x16xf32>
    %13 = vector.extract_strided_slice %11 {offsets = [0, 0], sizes = [1, 16], strides = [1, 1]} : vector<3x16xf32> to vector<1x16xf32>
    %14 = arith.mulf %12, %13 : vector<1x16xf32>
    %15 = vector.extract_strided_slice %11 {offsets = [1, 0], sizes = [1, 16], strides = [1, 1]} : vector<3x16xf32> to vector<1x16xf32>
    %16 = vector.extract_strided_slice %11 {offsets = [1, 0], sizes = [1, 16], strides = [1, 1]} : vector<3x16xf32> to vector<1x16xf32>
    %17 = arith.mulf %15, %16 : vector<1x16xf32>
    %18 = arith.addf %14, %17 : vector<1x16xf32>
    %19 = vector.extract_strided_slice %11 {offsets = [2, 0], sizes = [1, 16], strides = [1, 1]} : vector<3x16xf32> to vector<1x16xf32>
    %20 = vector.extract_strided_slice %11 {offsets = [2, 0], sizes = [1, 16], strides = [1, 1]} : vector<3x16xf32> to vector<1x16xf32>
    %21 = arith.mulf %19, %20 : vector<1x16xf32>
    %22 = arith.addf %18, %21 : vector<1x16xf32>
    %23 = vector.extract_strided_slice %7 {offsets = [0, 0], sizes = [16, 3], strides = [1, 1]} : vector<32x3xf32> to vector<16x3xf32>
    %24 = vector.extract_strided_slice %23 {offsets = [15, 0], sizes = [1, 3], strides = [1, 1]} : vector<16x3xf32> to vector<1x3xf32>
    %25 = vector.broadcast %24 : vector<1x3xf32> to vector<16x3xf32>
    %26 = arith.subf %23, %25 : vector<16x3xf32>
    %27 = vector.extract_strided_slice %26 {offsets = [0, 0], sizes = [16, 1], strides = [1, 1]} : vector<16x3xf32> to vector<16x1xf32>
    %28 = vector.extract_strided_slice %26 {offsets = [0, 0], sizes = [16, 1], strides = [1, 1]} : vector<16x3xf32> to vector<16x1xf32>
    %29 = arith.mulf %27, %28 : vector<16x1xf32>
    %30 = vector.extract_strided_slice %26 {offsets = [0, 1], sizes = [16, 1], strides = [1, 1]} : vector<16x3xf32> to vector<16x1xf32>
    %31 = vector.extract_strided_slice %26 {offsets = [0, 1], sizes = [16, 1], strides = [1, 1]} : vector<16x3xf32> to vector<16x1xf32>
    %32 = arith.mulf %30, %31 : vector<16x1xf32>
    %33 = arith.addf %29, %32 : vector<16x1xf32>
    %34 = vector.extract_strided_slice %26 {offsets = [0, 2], sizes = [16, 1], strides = [1, 1]} : vector<16x3xf32> to vector<16x1xf32>
    %35 = vector.extract_strided_slice %26 {offsets = [0, 2], sizes = [16, 1], strides = [1, 1]} : vector<16x3xf32> to vector<16x1xf32>
    %36 = arith.mulf %34, %35 : vector<16x1xf32>
    %37 = arith.addf %33, %36 : vector<16x1xf32>
    %38 = tpu.iota {dimensions = array<i32: 0>} : vector<16x16xi32>
    %39 = tpu.iota {dimensions = array<i32: 1>} : vector<16x16xi32>
    %40 = vector.broadcast %37 : vector<16x1xf32> to vector<16x16xf32>
    %41 = vector.broadcast %22 : vector<1x16xf32> to vector<16x16xf32>
    %42 = arith.cmpf olt, %40, %41 : vector<16x16xf32>
    %43 = vector.broadcast %37 : vector<16x1xf32> to vector<16x16xf32>
    %44 = vector.broadcast %22 : vector<1x16xf32> to vector<16x16xf32>
    %45 = arith.cmpf oeq, %43, %44 : vector<16x16xf32>
    %46 = arith.cmpi slt, %38, %39 : vector<16x16xi32>
    %47 = arith.andi %45, %46 : vector<16x16xi1>
    %48 = arith.ori %42, %47 : vector<16x16xi1>
    %49 = arith.extui %48 : vector<16x16xi1> to vector<16x16xi32>
    %cst_10 = arith.constant dense<0> : vector<16xi32>
    %50 = vector.multi_reduction <add>, %49, %cst_10 [0] : vector<16x16xi32> to vector<16xi32>
    %51 = vector.shape_cast %50 : vector<16xi32> to vector<1x16xi32>
    %52 = vector.extract_strided_slice %3 {offsets = [0, 0], sizes = [4, 16], strides = [1, 1]} : vector<4x32xf32> to vector<4x16xf32>
    %c0_i32 = arith.constant 0 : i32
    %53 = vector.broadcast %c0_i32 : i32 to vector<1x16xi32>
    %54 = arith.cmpi sge, %51, %53 : vector<1x16xi32>
    %c4_i32 = arith.constant 4 : i32
    %55 = vector.broadcast %c4_i32 : i32 to vector<1x16xi32>
    %56 = arith.cmpi slt, %51, %55 : vector<1x16xi32>
    %57 = arith.andi %54, %56 : vector<1x16xi1>
    %cst_11 = arith.constant 0xFF800000 : f32
    %58 = vector.shape_cast %57 : vector<1x16xi1> to vector<1x16xi1>
    %59 = vector.broadcast %58 : vector<1x16xi1> to vector<4x16xi1>
    %60 = vector.broadcast %cst_11 : f32 to vector<4x16xf32>
    %61 = arith.select %59, %52, %60 : vector<4x16xi1>, vector<4x16xf32>
    %cst_12 = arith.constant dense<0xFF800000> : vector<4xf32>
    %62 = vector.multi_reduction <maximumf>, %61, %cst_12 [1] : vector<4x16xf32> to vector<4xf32>
    %63 = vector.shape_cast %62 : vector<4xf32> to vector<4x1xf32>
    %c4_i32_13 = arith.constant 4 : i32
    %64 = vector.broadcast %c4_i32_13 : i32 to vector<1x16xi32>
    %65 = arith.cmpi sge, %51, %64 : vector<1x16xi32>
    %c8_i32 = arith.constant 8 : i32
    %66 = vector.broadcast %c8_i32 : i32 to vector<1x16xi32>
    %67 = arith.cmpi slt, %51, %66 : vector<1x16xi32>
    %68 = arith.andi %65, %67 : vector<1x16xi1>
    %cst_14 = arith.constant 0xFF800000 : f32
    %69 = vector.shape_cast %68 : vector<1x16xi1> to vector<1x16xi1>
    %70 = vector.broadcast %69 : vector<1x16xi1> to vector<4x16xi1>
    %71 = vector.broadcast %cst_14 : f32 to vector<4x16xf32>
    %72 = arith.select %70, %52, %71 : vector<4x16xi1>, vector<4x16xf32>
    %cst_15 = arith.constant dense<0xFF800000> : vector<4xf32>
    %73 = vector.multi_reduction <maximumf>, %72, %cst_15 [1] : vector<4x16xf32> to vector<4xf32>
    %74 = vector.shape_cast %73 : vector<4xf32> to vector<4x1xf32>
    %c8_i32_16 = arith.constant 8 : i32
    %75 = vector.broadcast %c8_i32_16 : i32 to vector<1x16xi32>
    %76 = arith.cmpi sge, %51, %75 : vector<1x16xi32>
    %c12_i32 = arith.constant 12 : i32
    %77 = vector.broadcast %c12_i32 : i32 to vector<1x16xi32>
    %78 = arith.cmpi slt, %51, %77 : vector<1x16xi32>
    %79 = arith.andi %76, %78 : vector<1x16xi1>
    %cst_17 = arith.constant 0xFF800000 : f32
    %80 = vector.shape_cast %79 : vector<1x16xi1> to vector<1x16xi1>
    %81 = vector.broadcast %80 : vector<1x16xi1> to vector<4x16xi1>
    %82 = vector.broadcast %cst_17 : f32 to vector<4x16xf32>
    %83 = arith.select %81, %52, %82 : vector<4x16xi1>, vector<4x16xf32>
    %cst_18 = arith.constant dense<0xFF800000> : vector<4xf32>
    %84 = vector.multi_reduction <maximumf>, %83, %cst_18 [1] : vector<4x16xf32> to vector<4xf32>
    %85 = vector.shape_cast %84 : vector<4xf32> to vector<4x1xf32>
    %c12_i32_19 = arith.constant 12 : i32
    %86 = vector.broadcast %c12_i32_19 : i32 to vector<1x16xi32>
    %87 = arith.cmpi sge, %51, %86 : vector<1x16xi32>
    %c16_i32 = arith.constant 16 : i32
    %88 = vector.broadcast %c16_i32 : i32 to vector<1x16xi32>
    %89 = arith.cmpi slt, %51, %88 : vector<1x16xi32>
    %90 = arith.andi %87, %89 : vector<1x16xi1>
    %cst_20 = arith.constant 0xFF800000 : f32
    %91 = vector.shape_cast %90 : vector<1x16xi1> to vector<1x16xi1>
    %92 = vector.broadcast %91 : vector<1x16xi1> to vector<4x16xi1>
    %93 = vector.broadcast %cst_20 : f32 to vector<4x16xf32>
    %94 = arith.select %92, %52, %93 : vector<4x16xi1>, vector<4x16xf32>
    %cst_21 = arith.constant dense<0xFF800000> : vector<4xf32>
    %95 = vector.multi_reduction <maximumf>, %94, %cst_21 [1] : vector<4x16xf32> to vector<4xf32>
    %96 = vector.shape_cast %95 : vector<4xf32> to vector<4x1xf32>
    %97 = vector.extract_strided_slice %5 {offsets = [0, 16], sizes = [3, 16], strides = [1, 1]} : vector<3x32xf32> to vector<3x16xf32>
    %98 = vector.extract_strided_slice %97 {offsets = [0, 15], sizes = [3, 1], strides = [1, 1]} : vector<3x16xf32> to vector<3x1xf32>
    %99 = vector.broadcast %98 : vector<3x1xf32> to vector<3x16xf32>
    %100 = arith.subf %97, %99 : vector<3x16xf32>
    %101 = vector.extract_strided_slice %100 {offsets = [0, 0], sizes = [1, 16], strides = [1, 1]} : vector<3x16xf32> to vector<1x16xf32>
    %102 = vector.extract_strided_slice %100 {offsets = [0, 0], sizes = [1, 16], strides = [1, 1]} : vector<3x16xf32> to vector<1x16xf32>
    %103 = arith.mulf %101, %102 : vector<1x16xf32>
    %104 = vector.extract_strided_slice %100 {offsets = [1, 0], sizes = [1, 16], strides = [1, 1]} : vector<3x16xf32> to vector<1x16xf32>
    %105 = vector.extract_strided_slice %100 {offsets = [1, 0], sizes = [1, 16], strides = [1, 1]} : vector<3x16xf32> to vector<1x16xf32>
    %106 = arith.mulf %104, %105 : vector<1x16xf32>
    %107 = arith.addf %103, %106 : vector<1x16xf32>
    %108 = vector.extract_strided_slice %100 {offsets = [2, 0], sizes = [1, 16], strides = [1, 1]} : vector<3x16xf32> to vector<1x16xf32>
    %109 = vector.extract_strided_slice %100 {offsets = [2, 0], sizes = [1, 16], strides = [1, 1]} : vector<3x16xf32> to vector<1x16xf32>
    %110 = arith.mulf %108, %109 : vector<1x16xf32>
    %111 = arith.addf %107, %110 : vector<1x16xf32>
    %112 = vector.extract_strided_slice %7 {offsets = [16, 0], sizes = [16, 3], strides = [1, 1]} : vector<32x3xf32> to vector<16x3xf32>
    %113 = vector.extract_strided_slice %112 {offsets = [15, 0], sizes = [1, 3], strides = [1, 1]} : vector<16x3xf32> to vector<1x3xf32>
    %114 = vector.broadcast %113 : vector<1x3xf32> to vector<16x3xf32>
    %115 = arith.subf %112, %114 : vector<16x3xf32>
    %116 = vector.extract_strided_slice %115 {offsets = [0, 0], sizes = [16, 1], strides = [1, 1]} : vector<16x3xf32> to vector<16x1xf32>
    %117 = vector.extract_strided_slice %115 {offsets = [0, 0], sizes = [16, 1], strides = [1, 1]} : vector<16x3xf32> to vector<16x1xf32>
    %118 = arith.mulf %116, %117 : vector<16x1xf32>
    %119 = vector.extract_strided_slice %115 {offsets = [0, 1], sizes = [16, 1], strides = [1, 1]} : vector<16x3xf32> to vector<16x1xf32>
    %120 = vector.extract_strided_slice %115 {offsets = [0, 1], sizes = [16, 1], strides = [1, 1]} : vector<16x3xf32> to vector<16x1xf32>
    %121 = arith.mulf %119, %120 : vector<16x1xf32>
    %122 = arith.addf %118, %121 : vector<16x1xf32>
    %123 = vector.extract_strided_slice %115 {offsets = [0, 2], sizes = [16, 1], strides = [1, 1]} : vector<16x3xf32> to vector<16x1xf32>
    %124 = vector.extract_strided_slice %115 {offsets = [0, 2], sizes = [16, 1], strides = [1, 1]} : vector<16x3xf32> to vector<16x1xf32>
    %125 = arith.mulf %123, %124 : vector<16x1xf32>
    %126 = arith.addf %122, %125 : vector<16x1xf32>
    %127 = tpu.iota {dimensions = array<i32: 0>} : vector<16x16xi32>
    %128 = tpu.iota {dimensions = array<i32: 1>} : vector<16x16xi32>
    %129 = vector.broadcast %126 : vector<16x1xf32> to vector<16x16xf32>
    %130 = vector.broadcast %111 : vector<1x16xf32> to vector<16x16xf32>
    %131 = arith.cmpf olt, %129, %130 : vector<16x16xf32>
    %132 = vector.broadcast %126 : vector<16x1xf32> to vector<16x16xf32>
    %133 = vector.broadcast %111 : vector<1x16xf32> to vector<16x16xf32>
    %134 = arith.cmpf oeq, %132, %133 : vector<16x16xf32>
    %135 = arith.cmpi slt, %127, %128 : vector<16x16xi32>
    %136 = arith.andi %134, %135 : vector<16x16xi1>
    %137 = arith.ori %131, %136 : vector<16x16xi1>
    %138 = arith.extui %137 : vector<16x16xi1> to vector<16x16xi32>
    %cst_22 = arith.constant dense<0> : vector<16xi32>
    %139 = vector.multi_reduction <add>, %138, %cst_22 [0] : vector<16x16xi32> to vector<16xi32>
    %140 = vector.shape_cast %139 : vector<16xi32> to vector<1x16xi32>
    %141 = vector.extract_strided_slice %3 {offsets = [0, 16], sizes = [4, 16], strides = [1, 1]} : vector<4x32xf32> to vector<4x16xf32>
    %c0_i32_23 = arith.constant 0 : i32
    %142 = vector.broadcast %c0_i32_23 : i32 to vector<1x16xi32>
    %143 = arith.cmpi sge, %140, %142 : vector<1x16xi32>
    %c4_i32_24 = arith.constant 4 : i32
    %144 = vector.broadcast %c4_i32_24 : i32 to vector<1x16xi32>
    %145 = arith.cmpi slt, %140, %144 : vector<1x16xi32>
    %146 = arith.andi %143, %145 : vector<1x16xi1>
    %cst_25 = arith.constant 0xFF800000 : f32
    %147 = vector.shape_cast %146 : vector<1x16xi1> to vector<1x16xi1>
    %148 = vector.broadcast %147 : vector<1x16xi1> to vector<4x16xi1>
    %149 = vector.broadcast %cst_25 : f32 to vector<4x16xf32>
    %150 = arith.select %148, %141, %149 : vector<4x16xi1>, vector<4x16xf32>
    %cst_26 = arith.constant dense<0xFF800000> : vector<4xf32>
    %151 = vector.multi_reduction <maximumf>, %150, %cst_26 [1] : vector<4x16xf32> to vector<4xf32>
    %152 = vector.shape_cast %151 : vector<4xf32> to vector<4x1xf32>
    %c4_i32_27 = arith.constant 4 : i32
    %153 = vector.broadcast %c4_i32_27 : i32 to vector<1x16xi32>
    %154 = arith.cmpi sge, %140, %153 : vector<1x16xi32>
    %c8_i32_28 = arith.constant 8 : i32
    %155 = vector.broadcast %c8_i32_28 : i32 to vector<1x16xi32>
    %156 = arith.cmpi slt, %140, %155 : vector<1x16xi32>
    %157 = arith.andi %154, %156 : vector<1x16xi1>
    %cst_29 = arith.constant 0xFF800000 : f32
    %158 = vector.shape_cast %157 : vector<1x16xi1> to vector<1x16xi1>
    %159 = vector.broadcast %158 : vector<1x16xi1> to vector<4x16xi1>
    %160 = vector.broadcast %cst_29 : f32 to vector<4x16xf32>
    %161 = arith.select %159, %141, %160 : vector<4x16xi1>, vector<4x16xf32>
    %cst_30 = arith.constant dense<0xFF800000> : vector<4xf32>
    %162 = vector.multi_reduction <maximumf>, %161, %cst_30 [1] : vector<4x16xf32> to vector<4xf32>
    %163 = vector.shape_cast %162 : vector<4xf32> to vector<4x1xf32>
    %c8_i32_31 = arith.constant 8 : i32
    %164 = vector.broadcast %c8_i32_31 : i32 to vector<1x16xi32>
    %165 = arith.cmpi sge, %140, %164 : vector<1x16xi32>
    %c12_i32_32 = arith.constant 12 : i32
    %166 = vector.broadcast %c12_i32_32 : i32 to vector<1x16xi32>
    %167 = arith.cmpi slt, %140, %166 : vector<1x16xi32>
    %168 = arith.andi %165, %167 : vector<1x16xi1>
    %cst_33 = arith.constant 0xFF800000 : f32
    %169 = vector.shape_cast %168 : vector<1x16xi1> to vector<1x16xi1>
    %170 = vector.broadcast %169 : vector<1x16xi1> to vector<4x16xi1>
    %171 = vector.broadcast %cst_33 : f32 to vector<4x16xf32>
    %172 = arith.select %170, %141, %171 : vector<4x16xi1>, vector<4x16xf32>
    %cst_34 = arith.constant dense<0xFF800000> : vector<4xf32>
    %173 = vector.multi_reduction <maximumf>, %172, %cst_34 [1] : vector<4x16xf32> to vector<4xf32>
    %174 = vector.shape_cast %173 : vector<4xf32> to vector<4x1xf32>
    %c12_i32_35 = arith.constant 12 : i32
    %175 = vector.broadcast %c12_i32_35 : i32 to vector<1x16xi32>
    %176 = arith.cmpi sge, %140, %175 : vector<1x16xi32>
    %c16_i32_36 = arith.constant 16 : i32
    %177 = vector.broadcast %c16_i32_36 : i32 to vector<1x16xi32>
    %178 = arith.cmpi slt, %140, %177 : vector<1x16xi32>
    %179 = arith.andi %176, %178 : vector<1x16xi1>
    %cst_37 = arith.constant 0xFF800000 : f32
    %180 = vector.shape_cast %179 : vector<1x16xi1> to vector<1x16xi1>
    %181 = vector.broadcast %180 : vector<1x16xi1> to vector<4x16xi1>
    %182 = vector.broadcast %cst_37 : f32 to vector<4x16xf32>
    %183 = arith.select %181, %141, %182 : vector<4x16xi1>, vector<4x16xf32>
    %cst_38 = arith.constant dense<0xFF800000> : vector<4xf32>
    %184 = vector.multi_reduction <maximumf>, %183, %cst_38 [1] : vector<4x16xf32> to vector<4xf32>
    %185 = vector.shape_cast %184 : vector<4xf32> to vector<4x1xf32>
    %186 = tpu.concatenate %63, %74, %85, %96, %152, %163, %174, %185 in 1 : vector<4x1xf32>, vector<4x1xf32>, vector<4x1xf32>, vector<4x1xf32>, vector<4x1xf32>, vector<4x1xf32>, vector<4x1xf32>, vector<4x1xf32> -> vector<4x8xf32>
    %c0_39 = arith.constant 0 : index
    %c0_40 = arith.constant 0 : index
    %c0_41 = arith.constant 0 : index
    %187 = vector.load %arg5[%c0_39, %c0_40, %c0_41] : memref<1x4x8xf32, #tpu.memory_space<vmem>>, vector<1x4x8xf32>
    %188 = vector.shape_cast %187 : vector<1x4x8xf32> to vector<4x8xf32>
    %189 = vector.shape_cast %186 : vector<4x8xf32> to vector<1x4x8xf32>
    tpu.vector_store %arg5[%c0_39, %c0_40, %c0_41], %189 {strides = array<i32>} : memref<1x4x8xf32, #tpu.memory_space<vmem>>, vector<1x4x8xf32>,
    return
  }
  func.func @transform_0(%arg0: i32) -> (i32, i32, i32) {
    %c0_i32 = arith.constant 0 : i32
    %c0_i32_0 = arith.constant 0 : i32
    %c0_i32_1 = arith.constant 0 : i32
    return %arg0, %c0_i32, %c0_i32_0 : i32, i32, i32
  }
  func.func @transform_1(%arg0: i32) -> (i32, i32) {
    %c0_i32 = arith.constant 0 : i32
    %c0_i32_0 = arith.constant 0 : i32
    %c0_i32_1 = arith.constant 0 : i32
    return %c0_i32, %c0_i32_0 : i32, i32
  }
  func.func @transform_2(%arg0: i32) -> (i32, i32, i32) {
    %c0_i32 = arith.constant 0 : i32
    %c0_i32_0 = arith.constant 0 : i32
    %c0_i32_1 = arith.constant 0 : i32
    return %arg0, %c0_i32, %c0_i32_0 : i32, i32, i32
  }
  func.func @transform_3(%arg0: i32) -> (i32, i32, i32) {
    %c0_i32 = arith.constant 0 : i32
    %c0_i32_0 = arith.constant 0 : i32
    %c0_i32_1 = arith.constant 0 : i32
    return %arg0, %c0_i32, %c0_i32_0 : i32, i32, i32
  }
  func.func @transform_4(%arg0: i32) -> (i32, i32, i32) {
    %c0_i32 = arith.constant 0 : i32
    %c0_i32_0 = arith.constant 0 : i32
    %c0_i32_1 = arith.constant 0 : i32
    return %arg0, %c0_i32, %c0_i32_0 : i32, i32, i32
  }
}

</mosaic_0001>

<llo_original>
// kernel: tpu_custom_call.1
$region0: #{tpu_custom_call.1}
  #allocation0 [shape = 'u32[]', space=smem, size = 0x4, offset = 0x4, fixed_abs, tag = 'smem constant byte address 0x4 - core index']
  #allocation1 [shape = 'u32[72,128]{1,0:T(1,128)}', space=vmem, size = 0x9000, scoped, tag = 'internal scratch']
  %s0 = inlined_call_operand.vmem [shape: bf16[1,16,32], index: 0, kind: input, shape index: {}]
  %s1 = inlined_call_operand.vmem [shape: bf16[4,16], index: 1, kind: input, shape index: {}]
  %s2 = inlined_call_operand.vmem [shape: f32[1,3,32], index: 2, kind: input, shape index: {}]
  %s3 = inlined_call_operand.vmem [shape: f32[1,32,3], index: 3, kind: input, shape index: {}]
  %s4 = inlined_call_operand.hbm [shape: f32[1,4,8], index: 4, kind: output, shape index: {}]
  %s5 = sld [smem:[#allocation0]]
  $region26: #{tpu_custom_call.1} parent=0
    _
  %s7 = ssub.s32 1, %s5
  %s8 = scalar_select 0, %s7, %s5
  $region1: #{tpu_custom_call.1} parent=0
    #allocation2 [shape = 'u8[2048]{0}', space=vmem, size = 0x800, scoped, tag = 'output window, operand 0, single buffered']
    #allocation3 [shape = 's32[1]{0}', space=sflag, size = 0x4, scoped, tag = 'scoped memory for tpu_custom_call.1']
    %9 = vsyncpa [#allocation3], 0
    // Predicated region
    $region2: #{tpu_custom_call.1} parent=1 // pred_check
      _
    $region3: #{tpu_custom_call.1} parent=1 // pred_check_branch
      %11 = sbr.rel (0) target = $region5
    $region4: #{tpu_custom_call.1} parent=1 // pred_region
      _
    $region5: #{tpu_custom_call.1} parent=1 // pred_fallthru
      _
    // Predicated region
    $region6: #{tpu_custom_call.1} parent=1 // pred_check
      _
    $region7: #{tpu_custom_call.1} parent=1 // pred_check_branch
      %13 = sbr.rel (0) target = $region9
    $region8: #{tpu_custom_call.1} parent=1 // pred_region
      _
    $region9: #{tpu_custom_call.1} parent=1 // pred_fallthru
      _
    // Predicated region
    $region10: #{tpu_custom_call.1} parent=1 // pred_check
      _
    $region11: #{tpu_custom_call.1} parent=1 // pred_check_branch
      %15 = sbr.rel (0) target = $region13
    $region12: #{tpu_custom_call.1} parent=1 // pred_region
      _
    $region13: #{tpu_custom_call.1} parent=1 // pred_fallthru
      _
    // Predicated region
    $region14: #{tpu_custom_call.1} parent=1 // pred_check
      _
    $region15: #{tpu_custom_call.1} parent=1 // pred_check_branch
      %17 = sbr.rel (0) target = $region17
    $region16: #{tpu_custom_call.1} parent=1 // pred_region
      _
    $region17: #{tpu_custom_call.1} parent=1 // pred_fallthru
      _
    %v19 = vld [vmem:[%s1] sm:$0x3]
    %v20 = vld [vmem:[%s0] sm:$0xf]
    %v21 = vld [vmem:[%s0 + $0x4] sm:$0xf]
    %v24 = vunpack.c.l.b16 %v20
    %v25 = vunpack.c.l.b16 %v21
    %v26 = vpack.c.b16 %v25, %v24
    %vm28 = vcmask 130048
    %v30 = vsel %vm28, %v19, 0
    %32 = vmatpush.bf16.msra.mxu0 0
    %33 = vmatpush.bf16.msra.mxu0 0
    %34 = vmatpush.bf16.msra.mxu0 0
    %35 = vmatpush.bf16.msra.mxu0 0
    %36 = vmatpush.bf16.msra.mxu0 0
    %37 = vmatpush.bf16.msra.mxu0 0
    %38 = vmatpush.bf16.msra.mxu0 0
    %39 = vmatpush.bf16.msra.mxu0 %v26
    %40 = vmatmul.bf16.gmra.mxu0 %v30
    %v41 = vpop.f32.mrf.mxu0
    %v42 = vadd.f32 0.0, %v41
    %v43 = vpop.f32.mrf.mxu0
    %44 = vdwg.mxu0
    %v45 = vld [vmem:[%s2] sm:$0x7]
    %v46 = vld [vmem:[%s3] sm:$0xff]
    %v47 = vld [vmem:[%s3 + $0x8] sm:$0xff]
    %v48 = vld [vmem:[%s3 + $0x10] sm:$0xff]
    %v49 = vld [vmem:[%s3 + $0x18] sm:$0xff]
    %51 = vset.pattern.permute.xlu0 15
    %52 = vperm.xlu0 %51, %v45
    %v53 = vpop.permute.xlu0 %52
    %v55 = vsub.f32 %v45, %v53
    %v56 = vmul.f32 %v55, %v55
    %v58 = vrot.slane %v56, 1
    %v60 = vadd.f32 %v56, %v58
    %v61 = vrot.slane %v56, 2
    %v63 = vadd.f32 %v60, %v61
    %v64 = vperm.slane %v47, 7
    %v65 = vsub.f32 %v46, %v64
    %v66 = vsub.f32 %v47, %v64
    %v67 = vmul.f32 %v65, %v65
    %v68 = vmul.f32 %v66, %v66
    %71 = vrot.lane.b32.xlu0 %v67, 127
    %v72 = vpop.permute.xlu0 %71
    %73 = vrot.lane.b32.xlu0 %v68, 127
    %v74 = vpop.permute.xlu0 %73
    %v77 = vadd.f32 %v67, %v72
    %v78 = vadd.f32 %v68, %v74
    %79 = vrot.lane.b32.xlu0 %v67, 126
    %v80 = vpop.permute.xlu0 %79
    %81 = vrot.lane.b32.xlu0 %v68, 126
    %v82 = vpop.permute.xlu0 %81
    %v85 = vadd.f32 %v77, %v80
    %v86 = vadd.f32 %v78, %v82
    %v87 = vlaneseq
    %v88 = vshrl.u32 %v87, 7
    %v89 = vadd.s32 %v88, 8
    %v90 = vlaneseq
    %v91 = vand.u32 %v90, 127
    %93 = vset.pattern.permute.xlu0 0
    %94 = vperm.xlu0 %93, %v85
    %v95 = vpop.permute.xlu0 %94
    %98 = vset.pattern.permute.xlu0 0
    %99 = vperm.xlu0 %98, %v86
    %v100 = vpop.permute.xlu0 %99
    %v102 = vperm.slane %v63, 0
    %vm103 = vcmp.lt.f32.partialorder %v95, %v102
    %vm104 = vcmp.lt.f32.partialorder %v100, %v102
    %vm105 = vcmp.eq.f32.partialorder %v95, %v102
    %vm106 = vcmp.eq.f32.partialorder %v100, %v102
    %vm107 = vcmp.lt.s32.totalorder %v88, %v91
    %vm108 = vcmp.lt.s32.totalorder %v89, %v91
    %vm109 = vmand %vm105, %vm107
    %vm110 = vmand %vm106, %vm108
    %vm111 = vmor %vm103, %vm109
    %vm112 = vmor %vm104, %vm110
    %v113 = vsel %vm111, 1, 0
    %v114 = vsel %vm112, 1, 0
    %v115 = vsel %vm28, %v113, 0
    %v116 = vsel %vm28, %v114, 0
    %v117 = vadd.s32 %v115, %v116
    %v118 = vrot.slane %v117, 4
    %v119 = vadd.s32 %v117, %v118
    %v120 = vrot.slane %v119, 2
    %v121 = vadd.s32 %v119, %v120
    %v122 = vrot.slane %v121, 1
    %v123 = vadd.s32 %v121, %v122
    %vm124 = vcmp.ge.s32.totalorder %v123, 0
    %vm125 = vcmp.lt.s32.totalorder %v123, 4
    %vm126 = vmand %vm124, %vm125
    %v127 = vsel %vm126, 1, 0
    %vm128 = vcmp.eq.s32.totalorder %v127, 1
    %v129 = vsel %vm128, %v42, -inf
    %vm130 = vcmask 125952
    %v131 = vsel %vm130, %v129, -inf
    %132 = vmax.xlane.f32.xlu0 %v131
    %v133 = vpop.xlane.xlu0 %132
    %vm134 = vcmp.ge.s32.totalorder %v123, 4
    %vm135 = vcmp.lt.s32.totalorder %v123, 8
    %vm136 = vmand %vm134, %vm135
    %v137 = vsel %vm136, 1, 0
    %vm138 = vcmp.eq.s32.totalorder %v137, 1
    %v139 = vsel %vm138, %v42, -inf
    %v140 = vsel %vm130, %v139, -inf
    %141 = vmax.xlane.f32.xlu0 %v140
    %v142 = vpop.xlane.xlu0 %141
    %vm143 = vcmp.ge.s32.totalorder %v123, 8
    %vm144 = vcmp.lt.s32.totalorder %v123, 12
    %vm145 = vmand %vm143, %vm144
    %v146 = vsel %vm145, 1, 0
    %vm147 = vcmp.eq.s32.totalorder %v146, 1
    %v148 = vsel %vm147, %v42, -inf
    %v149 = vsel %vm130, %v148, -inf
    %150 = vmax.xlane.f32.xlu0 %v149
    %v151 = vpop.xlane.xlu0 %150
    %vm152 = vcmp.ge.s32.totalorder %v123, 12
    %vm153 = vcmp.lt.s32.totalorder %v123, 16
    %vm154 = vmand %vm152, %vm153
    %v155 = vsel %vm154, 1, 0
    %vm156 = vcmp.eq.s32.totalorder %v155, 1
    %v157 = vsel %vm156, %v42, -inf
    %v158 = vsel %vm130, %v157, -inf
    %159 = vmax.xlane.f32.xlu0 %v158
    %v160 = vpop.xlane.xlu0 %159
    %161 = vset.pattern.permute.xlu0 31
    %162 = vperm.xlu0 %161, %v45
    %v163 = vpop.permute.xlu0 %162
    %v165 = vsub.f32 %v45, %v163
    %v166 = vmul.f32 %v165, %v165
    %v168 = vrot.slane %v166, 1
    %v170 = vadd.f32 %v166, %v168
    %v171 = vrot.slane %v166, 2
    %v173 = vadd.f32 %v170, %v171
    %v174 = vperm.slane %v49, 7
    %v175 = vsub.f32 %v48, %v174
    %v176 = vsub.f32 %v49, %v174
    %v177 = vmul.f32 %v175, %v175
    %v178 = vmul.f32 %v176, %v176
    %181 = vrot.lane.b32.xlu0 %v177, 127
    %v182 = vpop.permute.xlu0 %181
    %183 = vrot.lane.b32.xlu0 %v178, 127
    %v184 = vpop.permute.xlu0 %183
    %v187 = vadd.f32 %v177, %v182
    %v188 = vadd.f32 %v178, %v184
    %189 = vrot.lane.b32.xlu0 %v177, 126
    %v190 = vpop.permute.xlu0 %189
    %191 = vrot.lane.b32.xlu0 %v178, 126
    %v192 = vpop.permute.xlu0 %191
    %v195 = vadd.f32 %v187, %v190
    %v196 = vadd.f32 %v188, %v192
    %198 = vset.pattern.permute.xlu0 0
    %199 = vperm.xlu0 %198, %v195
    %v200 = vpop.permute.xlu0 %199
    %203 = vset.pattern.permute.xlu0 0
    %204 = vperm.xlu0 %203, %v196
    %v205 = vpop.permute.xlu0 %204
    %v207 = vperm.slane %v173, 0
    %vm208 = vcmp.lt.f32.partialorder %v200, %v207
    %vm209 = vcmp.lt.f32.partialorder %v205, %v207
    %vm210 = vcmp.eq.f32.partialorder %v200, %v207
    %vm211 = vcmp.eq.f32.partialorder %v205, %v207
    %v212 = vsel %vm107, 1, 0
    %v213 = vsel %vm108, 1, 0
    %214 = vrot.lane.b32.xlu0 %v212, 16
    %v215 = vpop.permute.xlu0 %214
    %216 = vrot.lane.b32.xlu0 %v213, 16
    %v217 = vpop.permute.xlu0 %216
    %vm218 = vcmp.ne.s32.totalorder %v215, 0
    %vm219 = vcmp.ne.s32.totalorder %v217, 0
    %vm220 = vmand %vm210, %vm218
    %vm221 = vmand %vm211, %vm219
    %vm222 = vmor %vm208, %vm220
    %vm223 = vmor %vm209, %vm221
    %v224 = vsel %vm222, 1, 0
    %v225 = vsel %vm223, 1, 0
    %vm226 = vcmask 261248
    %v227 = vsel %vm226, %v224, 0
    %v228 = vsel %vm226, %v225, 0
    %v229 = vadd.s32 %v227, %v228
    %v230 = vrot.slane %v229, 4
    %v231 = vadd.s32 %v229, %v230
    %v232 = vrot.slane %v231, 2
    %v233 = vadd.s32 %v231, %v232
    %v234 = vrot.slane %v233, 1
    %v235 = vadd.s32 %v233, %v234
    %vm236 = vcmp.ge.s32.totalorder %v235, 0
    %vm237 = vcmp.lt.s32.totalorder %v235, 4
    %vm238 = vmand %vm236, %vm237
    %v239 = vsel %vm238, 1, 0
    %vm240 = vcmp.eq.s32.totalorder %v239, 1
    %v241 = vsel %vm240, %v42, -inf
    %vm242 = vcmask 257152
    %v243 = vsel %vm242, %v241, -inf
    %244 = vmax.xlane.f32.xlu0 %v243
    %v245 = vpop.xlane.xlu0 %244
    %vm246 = vcmp.ge.s32.totalorder %v235, 4
    %vm247 = vcmp.lt.s32.totalorder %v235, 8
    %vm248 = vmand %vm246, %vm247
    %v249 = vsel %vm248, 1, 0
    %vm250 = vcmp.eq.s32.totalorder %v249, 1
    %v251 = vsel %vm250, %v42, -inf
    %v252 = vsel %vm242, %v251, -inf
    %253 = vmax.xlane.f32.xlu0 %v252
    %v254 = vpop.xlane.xlu0 %253
    %vm255 = vcmp.ge.s32.totalorder %v235, 8
    %vm256 = vcmp.lt.s32.totalorder %v235, 12
    %vm257 = vmand %vm255, %vm256
    %v258 = vsel %vm257, 1, 0
    %vm259 = vcmp.eq.s32.totalorder %v258, 1
    %v260 = vsel %vm259, %v42, -inf
    %v261 = vsel %vm242, %v260, -inf
    %262 = vmax.xlane.f32.xlu0 %v261
    %v263 = vpop.xlane.xlu0 %262
    %vm264 = vcmp.ge.s32.totalorder %v235, 12
    %vm265 = vcmp.lt.s32.totalorder %v235, 16
    %vm266 = vmand %vm264, %vm265
    %v267 = vsel %vm266, 1, 0
    %vm268 = vcmp.eq.s32.totalorder %v267, 1
    %v269 = vsel %vm268, %v42, -inf
    %v270 = vsel %vm242, %v269, -inf
    %271 = vmax.xlane.f32.xlu0 %v270
    %v272 = vpop.xlane.xlu0 %271
    %vm273 = vcmask 7168
    %v274 = vsel %vm273, %v133, %v142
    %vm275 = vcmask 15360
    %v276 = vsel %vm275, %v274, %v151
    %vm277 = vcmask 23552
    %v278 = vsel %vm277, %v276, %v160
    %vm279 = vcmask 31744
    %v280 = vsel %vm279, %v278, %v245
    %vm281 = vcmask 39936
    %v282 = vsel %vm281, %v280, %v254
    %vm283 = vcmask 48128
    %v284 = vsel %vm283, %v282, %v263
    %vm285 = vcmask 56320
    %v286 = vsel %vm285, %v284, %v272
    %vm287 = vcmask 60416
    %288 = vst.msk [vmem:[#allocation2] sm:$0xf] %vm287, %v286
    // Predicated region
    $region18: #{tpu_custom_call.1} parent=1 // pred_check
      _
    $region19: #{tpu_custom_call.1} parent=1 // pred_check_branch
      %290 = sbr.rel (0) target = $region21
    $region20: #{tpu_custom_call.1} parent=1 // pred_region
      %292 = vsyncadd [#allocation3], 0
      %s294 = sshll.u32 [#allocation2], 4
      %s295 = int_to_ptr.vmem [resolvable:$true] %s294
      %s296 = sshll.u32 %s4, 4
      %s297 = int_to_ptr.hbm [resolvable:$true] %s296
      %299 = dma.vmem_to_hbm [thread:$0]  %s295, 64, %s297, [#allocation3]
    $region21: #{tpu_custom_call.1} parent=1 // pred_fallthru
      _
    // Predicated region
    $region22: #{tpu_custom_call.1} parent=1 // pred_check
      _
    $region23: #{tpu_custom_call.1} parent=1 // pred_check_branch
      %301 = sbr.rel (0) target = $region25
    $region24: #{tpu_custom_call.1} parent=1 // pred_region
      %303 = dma.done [#allocation3], 64
    $region25: #{tpu_custom_call.1} parent=1 // pred_fallthru
      _
    %304 = vsyncpa [#allocation3], 1

</llo_original>
